<compile_context>
chip_gen: v5e
topology: v5e:2x2
jax: 0.10.0
libtpu: 0.0.40
codegen_flags: <defaults>
</compile_context>

<pallas_src>
import math
import jax
import jax.numpy as jnp
from jax.experimental import pallas as pl
from jax.experimental.pallas import tpu as pltpu

_INV_SQRT2 = 1.0 / math.sqrt(2.0)
_LN_EPS = 1e-5  # PyTorch LayerNorm default


def _round_up(x, m):
    return ((x + m - 1) // m) * m


def _lm_kernel(x_ref, w1_ref, b1_ref, gamma_ref, beta_ref, w2_ref, o_ref, ln_ref):
    # x_ref:     (tm, D)  tile of input rows            (native dtype)
    # w1_ref:    (D, D)   embed weight [in, out]        (resident)
    # b1_ref:    (1, D)   embed bias
    # gamma_ref: (1, D)   LayerNorm weight
    # beta_ref:  (1, D)   LayerNorm bias
    # w2_ref:    (D, tv)  head weight tile [in, out]
    # o_ref:     (tm, tv) output tile
    # ln_ref:    (tm, D)  VMEM scratch carrying GELU+LN result across vocab tiles

    @pl.when(pl.program_id(1) == 0)
    def _():
        # embed: x @ W1 + b1 -- native-dtype operands, f32 accumulation (MXU)
        h = jnp.dot(x_ref[...], w1_ref[...], preferred_element_type=jnp.float32)
        h = h + b1_ref[...].astype(jnp.float32)

        # exact (erf) GELU, matching torch.nn.functional.gelu default
        g = 0.5 * h * (1.0 + jax.lax.erf(h * _INV_SQRT2))

        # LayerNorm over last dim (biased variance, eps=1e-5), affine
        mean = jnp.mean(g, axis=-1, keepdims=True)
        centered = g - mean
        var = jnp.mean(centered * centered, axis=-1, keepdims=True)
        ln = centered * jax.lax.rsqrt(var + _LN_EPS)
        ln = ln * gamma_ref[...].astype(jnp.float32) + beta_ref[...].astype(jnp.float32)

        ln_ref[...] = ln.astype(ln_ref.dtype)

    # head: ln @ W2 tile (no bias), reused scratch across the vocab axis (MXU)
    o_ref[...] = jnp.dot(ln_ref[...], w2_ref[...],
                         preferred_element_type=jnp.float32).astype(o_ref.dtype)


def lm_layer(x, w1, b1, gamma, beta, w2, *, tm=256, tv=512):
    """x: (B, T, D); w1: (D, D) [in, out]; b1/gamma/beta: (D,); w2: (D, V) [in, out].

    tm: row tile (rounded to a multiple of 8); tv: vocab tile (rounded to a
    multiple of 128).  Sweep tm/tv upward until VMEM-limited on the target chip.
    """
    B, T, D = x.shape
    V = w2.shape[1]
    N = B * T

    # Hardware-friendly tile sizes.
    tm = _round_up(max(tm, 8), 8)
    tv = _round_up(max(tv, 128), 128)
    tm_eff = min(tm, _round_up(N, 8))        # never a tile bigger than the (padded) data
    tv_eff = min(tv, _round_up(V, 128))

    Np = _round_up(N, tm_eff)                # pad rows to the row tile
    Vp = _round_up(V, tv_eff)                # pad vocab to a lane-dense multiple of 128

    x2 = x.reshape(N, D)
    if Np != N:
        x2 = jnp.pad(x2, ((0, Np - N), (0, 0)))
    w2p = w2 if Vp == V else jnp.pad(w2, ((0, 0), (0, Vp - V)))

    b1_2 = b1.reshape(1, D)
    gamma_2 = gamma.reshape(1, D)
    beta_2 = beta.reshape(1, D)

    grid = (Np // tm_eff, Vp // tv_eff)

    # Rough VMEM budget (double-buffered tiles + scratch), capped at 64 MiB so the
    # same setting is safe on v7x (64 MiB/TC) as well as v5e/v6e (128 MiB).
    xb = jnp.dtype(x.dtype).itemsize
    wb = jnp.dtype(w1.dtype).itemsize
    est = (2 * tm_eff * D * xb            # x tiles
           + 2 * D * D * wb               # W1 (constant-index, still 2 buffers)
           + 2 * 3 * D * 4                # b1 / gamma / beta
           + 2 * D * tv_eff * wb          # W2 tiles
           + 2 * tm_eff * tv_eff * xb     # output tiles
           + tm_eff * D * xb)             # ln scratch
    vmem_limit = min(max(2 * est, 32 << 20), 64 << 20)

    cost = pl.CostEstimate(
        flops=2 * Np * D * (D + Vp),
        transcendentals=Np * D,
        bytes_accessed=(Np * D + Np * Vp) * xb + (D * D + D * Vp + 3 * D) * wb,
    )

    out2 = pl.pallas_call(
        _lm_kernel,
        out_shape=jax.ShapeDtypeStruct((Np, Vp), x.dtype),
        grid_spec=pltpu.PrefetchScalarGridSpec(
            num_scalar_prefetch=0,
            grid=grid,
            in_specs=[
                pl.BlockSpec((tm_eff, D), lambda i, j: (i, 0)),   # x rows
                pl.BlockSpec((D, D), lambda i, j: (0, 0)),        # W1 (resident)
                pl.BlockSpec((1, D), lambda i, j: (0, 0)),        # b1
                pl.BlockSpec((1, D), lambda i, j: (0, 0)),        # gamma
                pl.BlockSpec((1, D), lambda i, j: (0, 0)),        # beta
                pl.BlockSpec((D, tv_eff), lambda i, j: (0, j)),   # W2 vocab tile
            ],
            out_specs=pl.BlockSpec((tm_eff, tv_eff), lambda i, j: (i, j)),
            scratch_shapes=[pltpu.VMEM((tm_eff, D), x.dtype)],    # GELU+LN carry
        ),
        compiler_params=pltpu.CompilerParams(
            dimension_semantics=("parallel", "arbitrary"),
            vmem_limit_bytes=vmem_limit,
        ),
        cost_estimate=cost,
        # NOTE: resident operands (W1/b1/gamma/beta) could be single-buffered via
        # pipeline_mode=pl.Buffered(1) to free VMEM for larger tm/tv if needed.
    )(x2, w1, b1_2, gamma_2, beta_2, w2p)

    return out2[:N, :V].reshape(B, T, V)


def _reference(x, w1, b1, gamma, beta, w2):
    h = jnp.einsum("btd,de->bte", x, w1) + b1
    g = 0.5 * h * (1.0 + jax.lax.erf(h * _INV_SQRT2))
    mean = jnp.mean(g, axis=-1, keepdims=True)
    var = jnp.mean((g - mean) ** 2, axis=-1, keepdims=True)
    ln = (g - mean) * jax.lax.rsqrt(var + _LN_EPS) * gamma + beta
    return jnp.einsum("btd,dv->btv", ln, w2)


def _make_params(key, n_embd, n_vocab):
    kw1, kb1, kw2 = jax.random.split(key, 3)
    lim = 1.0 / math.sqrt(n_embd)
    w1 = jax.random.uniform(kw1, (n_embd, n_embd), minval=-lim, maxval=lim,
                            dtype=jnp.float32)            # [in, out]
    b1 = jax.random.uniform(kb1, (n_embd,), minval=-lim, maxval=lim,
                            dtype=jnp.float32)
    gamma = jnp.ones((n_embd,), dtype=jnp.float32)
    beta = jnp.zeros((n_embd,), dtype=jnp.float32)
    w2 = jax.random.uniform(kw2, (n_embd, n_vocab), minval=-lim, maxval=lim,
                            dtype=jnp.float32)            # [in, out], no bias
    return w1, b1, gamma, beta, w2


if __name__ == "__main__":
    key = jax.random.PRNGKey(0)
    k1, k2, k3, k4 = jax.random.split(key, 4)

    # Case 1: small shapes consistent with the module (B=2, T=8, D=32, V=64).
    B, T, D, V = 2, 8, 32, 64
    x = jax.random.normal(k1, (B, T, D), dtype=jnp.float32)
    w1, b1, gamma, beta, w2 = _make_params(k2, D, V)
    out = lm_layer(x, w1, b1, gamma, beta, w2)
    jax.block_until_ready(out)
    ref = _reference(x, w1, b1, gamma, beta, w2)
    assert out.shape == (B, T, V)
    assert jnp.allclose(out, ref, atol=1e-3, rtol=1e-3)

    # Case 2: exercises multi-tile grid, row padding (N=200 -> 256) and vocab
    # padding (V=384 -> 512) with the scratch carried across vocab tiles.
    B, T, D, V = 2, 100, 128, 384
    x = jax.random.normal(k3, (B, T, D), dtype=jnp.float32)
    w1, b1, gamma, beta, w2 = _make_params(k4, D, V)
    out = lm_layer(x, w1, b1, gamma, beta, w2, tm=64, tv=256)
    jax.block_until_ready(out)
    ref = _reference(x, w1, b1, gamma, beta, w2)
    assert out.shape == (B, T, V)
    assert jnp.allclose(out, ref, atol=1e-3, rtol=1e-3)

    print("KERNEL_OK")
</pallas_src>

<mosaic_0001>
module attributes {stable_mosaic.version = 11 : i64} {
  func.func @_lm_kernel(%arg0: i32, %arg1: i32, %arg2: memref<16x32xf32, #tpu.memory_space<vmem>>, %arg3: memref<32x32xf32, #tpu.memory_space<vmem>>, %arg4: memref<1x32xf32, #tpu.memory_space<vmem>>, %arg5: memref<1x32xf32, #tpu.memory_space<vmem>>, %arg6: memref<1x32xf32, #tpu.memory_space<vmem>>, %arg7: memref<32x128xf32, #tpu.memory_space<vmem>>, %arg8: memref<16x128xf32, #tpu.memory_space<vmem>>, %arg9: memref<16x32xf32, #tpu.memory_space<vmem>>) attributes {dimension_semantics = [#tpu.dimension_semantics<parallel>, #tpu.dimension_semantics<arbitrary>], iteration_bounds = array<i64: 1, 1>, scalar_prefetch = 0 : i64, scratch_operands = 1 : i64, tpu.core_type = #tpu.core_type<tc>, window_params = [{transform_indices = @transform_0, window_bounds = array<i64: 16, 32>}, {pipeline_mode = #tpu.pipeline_mode<synchronous>, transform_indices = @transform_1, window_bounds = array<i64: 32, 32>}, {pipeline_mode = #tpu.pipeline_mode<synchronous>, transform_indices = @transform_2, window_bounds = array<i64: 1, 32>}, {pipeline_mode = #tpu.pipeline_mode<synchronous>, transform_indices = @transform_3, window_bounds = array<i64: 1, 32>}, {pipeline_mode = #tpu.pipeline_mode<synchronous>, transform_indices = @transform_4, window_bounds = array<i64: 1, 32>}, {transform_indices = @transform_5, window_bounds = array<i64: 32, 128>}, {transform_indices = @transform_6, window_bounds = array<i64: 16, 128>}]} {
    %c0_i32 = arith.constant 0 : i32
    %0 = arith.cmpi eq, %arg1, %c0_i32 : i32
    %1 = arith.extui %0 : i1 to i32
    %c0_i32_0 = arith.constant 0 : i32
    %2 = arith.cmpi ne, %1, %c0_i32_0 : i32
    scf.if %2 {
      %c0_6 = arith.constant 0 : index
      %c0_7 = arith.constant 0 : index
      %7 = vector.load %arg2[%c0_6, %c0_7] : memref<16x32xf32, #tpu.memory_space<vmem>>, vector<16x32xf32>
      %c0_8 = arith.constant 0 : index
      %c0_9 = arith.constant 0 : index
      %8 = vector.load %arg3[%c0_8, %c0_9] : memref<32x32xf32, #tpu.memory_space<vmem>>, vector<32x32xf32>
      %cst_10 = arith.constant dense<0.000000e+00> : vector<16x32xf32>
      %9 = tpu.matmul %7, %8, %cst_10 {dimension_numbers = #tpu.dot_dimension_numbers<[1], [0], [0], [1], [0, 0, 1, 1], [], []>} : vector<16x32xf32>, vector<32x32xf32>, vector<16x32xf32> -> vector<16x32xf32>
      %c0_11 = arith.constant 0 : index
      %c0_12 = arith.constant 0 : index
      %10 = vector.load %arg4[%c0_11, %c0_12] : memref<1x32xf32, #tpu.memory_space<vmem>>, vector<1x32xf32>
      %11 = vector.broadcast %10 : vector<1x32xf32> to vector<16x32xf32>
      %12 = arith.addf %9, %11 : vector<16x32xf32>
      %cst_13 = arith.constant 5.000000e-01 : f32
      %13 = vector.broadcast %cst_13 : f32 to vector<16x32xf32>
      %14 = arith.mulf %13, %12 : vector<16x32xf32>
      %cst_14 = arith.constant 0.707106769 : f32
      %15 = vector.broadcast %cst_14 : f32 to vector<16x32xf32>
      %16 = arith.mulf %12, %15 : vector<16x32xf32>
      %17 = math.erf %16 : vector<16x32xf32>
      %cst_15 = arith.constant 1.000000e+00 : f32
      %18 = vector.broadcast %cst_15 : f32 to vector<16x32xf32>
      %19 = arith.addf %18, %17 : vector<16x32xf32>
      %20 = arith.mulf %14, %19 : vector<16x32xf32>
      %cst_16 = arith.constant dense<0.000000e+00> : vector<16xf32>
      %21 = vector.multi_reduction <add>, %20, %cst_16 [1] : vector<16x32xf32> to vector<16xf32>
      %22 = vector.shape_cast %21 : vector<16xf32> to vector<16x1xf32>
      %cst_17 = arith.constant 3.200000e+01 : f32
      %23 = vector.broadcast %cst_17 : f32 to vector<16x1xf32>
      %24 = arith.divf %22, %23 : vector<16x1xf32>
      %25 = vector.broadcast %24 : vector<16x1xf32> to vector<16x32xf32>
      %26 = arith.subf %20, %25 : vector<16x32xf32>
      %27 = arith.mulf %26, %26 : vector<16x32xf32>
      %cst_18 = arith.constant dense<0.000000e+00> : vector<16xf32>
      %28 = vector.multi_reduction <add>, %27, %cst_18 [1] : vector<16x32xf32> to vector<16xf32>
      %29 = vector.shape_cast %28 : vector<16xf32> to vector<16x1xf32>
      %cst_19 = arith.constant 3.200000e+01 : f32
      %30 = vector.broadcast %cst_19 : f32 to vector<16x1xf32>
      %31 = arith.divf %29, %30 : vector<16x1xf32>
      %cst_20 = arith.constant 9.99999974E-6 : f32
      %32 = vector.broadcast %cst_20 : f32 to vector<16x1xf32>
      %33 = arith.addf %31, %32 : vector<16x1xf32>
      %34 = math.rsqrt %33 : vector<16x1xf32>
      %35 = vector.broadcast %34 : vector<16x1xf32> to vector<16x32xf32>
      %36 = arith.mulf %26, %35 : vector<16x32xf32>
      %c0_21 = arith.constant 0 : index
      %c0_22 = arith.constant 0 : index
      %37 = vector.load %arg5[%c0_21, %c0_22] : memref<1x32xf32, #tpu.memory_space<vmem>>, vector<1x32xf32>
      %38 = vector.broadcast %37 : vector<1x32xf32> to vector<16x32xf32>
      %39 = arith.mulf %36, %38 : vector<16x32xf32>
      %c0_23 = arith.constant 0 : index
      %c0_24 = arith.constant 0 : index
      %40 = vector.load %arg6[%c0_23, %c0_24] : memref<1x32xf32, #tpu.memory_space<vmem>>, vector<1x32xf32>
      %41 = vector.broadcast %40 : vector<1x32xf32> to vector<16x32xf32>
      %42 = arith.addf %39, %41 : vector<16x32xf32>
      %c0_25 = arith.constant 0 : index
      %c0_26 = arith.constant 0 : index
      %43 = vector.load %arg9[%c0_25, %c0_26] : memref<16x32xf32, #tpu.memory_space<vmem>>, vector<16x32xf32>
      tpu.vector_store %arg9[%c0_25, %c0_26], %42 {strides = array<i32>} : memref<16x32xf32, #tpu.memory_space<vmem>>, vector<16x32xf32>,
    } else {
    }
    %c0 = arith.constant 0 : index
    %c0_1 = arith.constant 0 : index
    %3 = vector.load %arg9[%c0, %c0_1] : memref<16x32xf32, #tpu.memory_space<vmem>>, vector<16x32xf32>
    %c0_2 = arith.constant 0 : index
    %c0_3 = arith.constant 0 : index
    %4 = vector.load %arg7[%c0_2, %c0_3] : memref<32x128xf32, #tpu.memory_space<vmem>>, vector<32x128xf32>
    %cst = arith.constant dense<0.000000e+00> : vector<16x128xf32>
    %5 = tpu.matmul %3, %4, %cst {dimension_numbers = #tpu.dot_dimension_numbers<[1], [0], [0], [1], [0, 0, 1, 1], [], []>} : vector<16x32xf32>, vector<32x128xf32>, vector<16x128xf32> -> vector<16x128xf32>
    %c0_4 = arith.constant 0 : index
    %c0_5 = arith.constant 0 : index
    %6 = vector.load %arg8[%c0_4, %c0_5] : memref<16x128xf32, #tpu.memory_space<vmem>>, vector<16x128xf32>
    tpu.vector_store %arg8[%c0_4, %c0_5], %5 {strides = array<i32>} : memref<16x128xf32, #tpu.memory_space<vmem>>, vector<16x128xf32>,
    return
  }
  func.func @transform_0(%arg0: i32, %arg1: i32) -> (i32, i32) {
    %c0_i32 = arith.constant 0 : i32
    %c0_i32_0 = arith.constant 0 : i32
    return %arg0, %c0_i32 : i32, i32
  }
  func.func @transform_1(%arg0: i32, %arg1: i32) -> (i32, i32) {
    %c0_i32 = arith.constant 0 : i32
    %c0_i32_0 = arith.constant 0 : i32
    %c0_i32_1 = arith.constant 0 : i32
    return %c0_i32, %c0_i32_0 : i32, i32
  }
  func.func @transform_2(%arg0: i32, %arg1: i32) -> (i32, i32) {
    %c0_i32 = arith.constant 0 : i32
    %c0_i32_0 = arith.constant 0 : i32
    %c0_i32_1 = arith.constant 0 : i32
    return %c0_i32, %c0_i32_0 : i32, i32
  }
  func.func @transform_3(%arg0: i32, %arg1: i32) -> (i32, i32) {
    %c0_i32 = arith.constant 0 : i32
    %c0_i32_0 = arith.constant 0 : i32
    %c0_i32_1 = arith.constant 0 : i32
    return %c0_i32, %c0_i32_0 : i32, i32
  }
  func.func @transform_4(%arg0: i32, %arg1: i32) -> (i32, i32) {
    %c0_i32 = arith.constant 0 : i32
    %c0_i32_0 = arith.constant 0 : i32
    %c0_i32_1 = arith.constant 0 : i32
    return %c0_i32, %c0_i32_0 : i32, i32
  }
  func.func @transform_5(%arg0: i32, %arg1: i32) -> (i32, i32) {
    %c0_i32 = arith.constant 0 : i32
    %c0_i32_0 = arith.constant 0 : i32
    return %c0_i32, %arg1 : i32, i32
  }
  func.func @transform_6(%arg0: i32, %arg1: i32) -> (i32, i32) {
    %c0_i32 = arith.constant 0 : i32
    return %arg0, %arg1 : i32, i32
  }
}

</mosaic_0001>

<llo_original>
// kernel: tpu_custom_call.1
$region0: #{tpu_custom_call.1}
  #allocation0 [shape = 'u32[]', space=smem, size = 0x4, offset = 0x4, fixed_abs, tag = 'smem constant byte address 0x4 - core index']
  #allocation1 [shape = 'u32[72,128]{1,0:T(1,128)}', space=vmem, size = 0x9000, scoped, tag = 'internal scratch']
  #allocation2 [shape = 'f32[16,32]{1,0:T(8,128)}', space=vmem, size = 0x2000, scoped, tag = 'scratch operand']
  %s0 = inlined_call_operand.hbm [shape: f32[16,32], index: 0, kind: input, shape index: {}]
  %s1 = inlined_call_operand.hbm [shape: f32[32,32], index: 1, kind: input, shape index: {}]
  %s2 = inlined_call_operand.vmem [shape: f32[1,32], index: 2, kind: input, shape index: {}]
  %s3 = inlined_call_operand.vmem [shape: f32[1,32], index: 3, kind: input, shape index: {}]
  %s4 = inlined_call_operand.vmem [shape: f32[1,32], index: 4, kind: input, shape index: {}]
  %s5 = inlined_call_operand.hbm [shape: f32[32,128], index: 5, kind: input, shape index: {}]
  %s6 = inlined_call_operand.hbm [shape: f32[16,128], index: 6, kind: output, shape index: {}]
  %s7 = sld [smem:[#allocation0]]
  $region50: #{tpu_custom_call.1} parent=0
    _
  %s9 = ssub.s32 1, %s7
  %s10 = scalar_select 0, %s9, %s7
  $region1: #{tpu_custom_call.1} parent=0
    #allocation3 [shape = 'u8[8192]{0}', space=vmem, size = 0x2000, scoped, tag = 'input window, operand 0, single buffered']
    #allocation4 [shape = 's32[1]{0}', space=sflag, size = 0x4, scoped, tag = 'scoped memory for tpu_custom_call.1']
    #allocation5 [shape = 's32[1]{0}', space=sflag, size = 0x4, scoped, tag = 'scoped memory for tpu_custom_call.1']
    #allocation6 [shape = 'u8[16384]{0}', space=vmem, size = 0x4000, scoped, tag = 'input window, operand 1, single buffered']
    #allocation7 [shape = 's32[1]{0}', space=sflag, size = 0x4, scoped, tag = 'scoped memory for tpu_custom_call.1']
    #allocation8 [shape = 'u8[16384]{0}', space=vmem, size = 0x4000, scoped, tag = 'input window, operand 5, single buffered']
    #allocation9 [shape = 'u8[8192]{0}', space=vmem, size = 0x2000, scoped, tag = 'output window, operand 0, single buffered']
    %11 = vsyncpa [#allocation4], 0
    %12 = vsyncpa [#allocation7], 0
    %13 = vsyncpa [#allocation5], 0
    // Predicated region
    $region2: #{tpu_custom_call.1} parent=1 // pred_check
      _
    $region3: #{tpu_custom_call.1} parent=1 // pred_check_branch
      %15 = sbr.rel (0) target = $region5
    $region4: #{tpu_custom_call.1} parent=1 // pred_region
      %17 = vsyncadd [#allocation4], 0
      %s18 = sshll.u32 %s0, 4
      %s19 = int_to_ptr.hbm [resolvable:$true] %s18
      %s20 = sshll.u32 [#allocation3], 4
      %s21 = int_to_ptr.vmem [resolvable:$true] %s20
      %26 = dma.hbm_to_vmem [thread:$0]  %s19, 256, %s21, [#allocation4], 128, 128, 8
    $region5: #{tpu_custom_call.1} parent=1 // pred_fallthru
      _
    // Predicated region
    $region6: #{tpu_custom_call.1} parent=1 // pred_check
      _
    $region7: #{tpu_custom_call.1} parent=1 // pred_check_branch
      %28 = sbr.rel (0) target = $region9
    $region8: #{tpu_custom_call.1} parent=1 // pred_region
      %30 = vsyncadd [#allocation7], 0
      %s31 = sshll.u32 %s1, 4
      %s32 = int_to_ptr.hbm [resolvable:$true] %s31
      %s33 = sshll.u32 [#allocation6], 4
      %s34 = int_to_ptr.vmem [resolvable:$true] %s33
      %39 = dma.hbm_to_vmem [thread:$0]  %s32, 512, %s34, [#allocation7], 128, 128, 8
    $region9: #{tpu_custom_call.1} parent=1 // pred_fallthru
      _
    // Predicated region
    $region10: #{tpu_custom_call.1} parent=1 // pred_check
      _
    $region11: #{tpu_custom_call.1} parent=1 // pred_check_branch
      %41 = sbr.rel (0) target = $region13
    $region12: #{tpu_custom_call.1} parent=1 // pred_region
      _
    $region13: #{tpu_custom_call.1} parent=1 // pred_fallthru
      _
    // Predicated region
    $region14: #{tpu_custom_call.1} parent=1 // pred_check
      _
    $region15: #{tpu_custom_call.1} parent=1 // pred_check_branch
      %43 = sbr.rel (0) target = $region17
    $region16: #{tpu_custom_call.1} parent=1 // pred_region
      _
    $region17: #{tpu_custom_call.1} parent=1 // pred_fallthru
      _
    // Predicated region
    $region18: #{tpu_custom_call.1} parent=1 // pred_check
      _
    $region19: #{tpu_custom_call.1} parent=1 // pred_check_branch
      %45 = sbr.rel (0) target = $region21
    $region20: #{tpu_custom_call.1} parent=1 // pred_region
      _
    $region21: #{tpu_custom_call.1} parent=1 // pred_fallthru
      _
    // Predicated region
    $region22: #{tpu_custom_call.1} parent=1 // pred_check
      _
    $region23: #{tpu_custom_call.1} parent=1 // pred_check_branch
      %47 = sbr.rel (0) target = $region25
    $region24: #{tpu_custom_call.1} parent=1 // pred_region
      %49 = vsyncadd [#allocation7], 0
      %s50 = sshll.u32 %s5, 4
      %s51 = int_to_ptr.hbm [resolvable:$true] %s50
      %s52 = sshll.u32 [#allocation8], 4
      %s53 = int_to_ptr.vmem [resolvable:$true] %s52
      %58 = dma.hbm_to_vmem [thread:$0]  %s51, 512, %s53, [#allocation7], 128, 128, 8
    $region25: #{tpu_custom_call.1} parent=1 // pred_fallthru
      _
    // Predicated region
    $region26: #{tpu_custom_call.1} parent=1 // pred_check
      _
    $region27: #{tpu_custom_call.1} parent=1 // pred_check_branch
      %60 = sbr.rel (0) target = $region29
    $region28: #{tpu_custom_call.1} parent=1 // pred_region
      %62 = dma.done [#allocation4], 256
    $region29: #{tpu_custom_call.1} parent=1 // pred_fallthru
      _
    // Predicated region
    $region30: #{tpu_custom_call.1} parent=1 // pred_check
      _
    $region31: #{tpu_custom_call.1} parent=1 // pred_check_branch
      %64 = sbr.rel (0) target = $region33
    $region32: #{tpu_custom_call.1} parent=1 // pred_region
      %66 = dma.done [#allocation7], 512
    $region33: #{tpu_custom_call.1} parent=1 // pred_fallthru
      _
    // Predicated region
    $region34: #{tpu_custom_call.1} parent=1 // pred_check
      _
    $region35: #{tpu_custom_call.1} parent=1 // pred_check_branch
      %68 = sbr.rel (0) target = $region37
    $region36: #{tpu_custom_call.1} parent=1 // pred_region
      %70 = dma.done [#allocation7], 512
    $region37: #{tpu_custom_call.1} parent=1 // pred_fallthru
      _
    %p71 = scmp.eq.s32.totalorder 0, 0
    // Predicated region
    $region38: #{tpu_custom_call.1} parent=1 // pred_check
      %p72 = pneg %p71
    $region39: #{tpu_custom_call.1} parent=1 // pred_check_branch
      %74 = sbr.rel (%p72) target = $region41
    $region40: #{tpu_custom_call.1} parent=1 // pred_region
      %v75 = vld [vmem:[#allocation3] sm:$0xff]
      %v76 = vld [vmem:[#allocation3 + $0x8] sm:$0xff]
      %v77 = vld [vmem:[#allocation6] sm:$0xff]
      %v78 = vld [vmem:[#allocation6 + $0x8] sm:$0xff]
      %v79 = vld [vmem:[#allocation6 + $0x10] sm:$0xff]
      %v80 = vld [vmem:[#allocation6 + $0x18] sm:$0xff]
      %v81 = vld [vmem:[%s2] sm:$0x1]
      %v83 = vperm.slane %v81, 0
      %vm85 = vcmask 261120
      %v87 = vsel %vm85, %v75, 0
      %v90 = vsel %vm85, %v76, 0
      %92 = vmatpush.msra.mxu0 0.0
      %93 = vmatpush.msra.mxu0 0.0
      %94 = vmatpush.msra.mxu0 0.0
      %95 = vmatpush.msra.mxu0 0.0
      %96 = vmatpush.msra.mxu0 0.0
      %97 = vmatpush.msra.mxu0 0.0
      %98 = vmatpush.msra.mxu0 0.0
      %99 = vmatpush.msra.mxu0 0.0
      %100 = vmatpush.msra.mxu0 0.0
      %101 = vmatpush.msra.mxu0 0.0
      %102 = vmatpush.msra.mxu0 0.0
      %103 = vmatpush.msra.mxu0 0.0
      %104 = vmatpush.msra.mxu0 %v80
      %105 = vmatpush.msra.mxu0 %v79
      %106 = vmatpush.msra.mxu0 %v78
      %107 = vmatpush.msra.mxu0 %v77
      %108 = vmatmul.f32.gmra.mxu0 %v87
      %v109 = vpop.f32.mrf.mxu0
      %v110 = vadd.f32 %v83, %v109
      %111 = vmatmul.f32.gmra.mxu0 %v90
      %v112 = vpop.f32.mrf.mxu0
      %v113 = vadd.f32 %v83, %v112
      %114 = vdwg.mxu0
      %v115 = vmul.f32 %v110, 0.5
      %v116 = vmul.f32 %v113, 0.5
      %v117 = vmul.f32 %v110, 0.70710677
      %v118 = vmul.f32 %v113, 0.70710677
      %v119 = vmul.f32 %v117, %v117
      %v120 = vmin.f32 16.0, %v119
      %v121 = vmul.f32 %v120, 2.1237322e-06
      %v122 = vadd.f32 %v121, 0.00028619796
      %v123 = vmul.f32 %v120, %v122
      %v124 = vadd.f32 %v123, 0.0036580483
      %v125 = vmul.f32 %v120, %v124
      %v126 = vadd.f32 %v125, 0.05243302
      %v127 = vmul.f32 %v120, %v126
      %v128 = vadd.f32 %v127, 0.18741608
      %v129 = vmul.f32 %v120, %v128
      %v130 = vadd.f32 %v129, 1.1283791
      %v131 = vmul.f32 %v117, %v130
      %v132 = vmul.f32 %v120, 3.8918573e-05
      %v133 = vadd.f32 %v132, 0.001143296
      %v134 = vmul.f32 %v120, %v133
      %v135 = vadd.f32 %v134, 0.014752088
      %v136 = vmul.f32 %v120, %v135
      %v137 = vadd.f32 %v136, 0.112945676
      %v138 = vmul.f32 %v120, %v137
      %v139 = vadd.f32 %v138, 0.4994258
      %v140 = vmul.f32 %v120, %v139
      %v141 = vadd.f32 %v140, 1.0
      %v142 = vrcp.pop %v141
      %v143 = vmul.f32 %v141, %v142
      %v144 = vsub.f32 1.0, %v143
      %v145 = vmul.f32 %v142, %v144
      %v146 = vadd.f32 %v142, %v145
      %vm147 = vweird.f32 %v141
      %vm148 = vweird.f32 %v142
      %vm149 = vmor %vm147, %vm148
      %v150 = vsel %vm149, %v142, %v146
      %v151 = vand.u32 2147483647, %v141
      %vm152 = vcmp.eq.f32.partialorder %v151, 8.507059e+37
      %v153 = vand.u32 %v141, 2147483648
      %v154 = vor.u32 1.1754944e-38, %v153
      %v155 = vsel %vm152, %v154, %v150
      %v156 = vmul.f32 %v131, %v155
      %v157 = vmin.f32 %v156, 1.0
      %v158 = vmax.f32 %v157, -1.0
      %v159 = vmul.f32 %v118, %v118
      %v160 = vmin.f32 16.0, %v159
      %v161 = vmul.f32 %v160, 2.1237322e-06
      %v162 = vadd.f32 %v161, 0.00028619796
      %v163 = vmul.f32 %v160, %v162
      %v164 = vadd.f32 %v163, 0.0036580483
      %v165 = vmul.f32 %v160, %v164
      %v166 = vadd.f32 %v165, 0.05243302
      %v167 = vmul.f32 %v160, %v166
      %v168 = vadd.f32 %v167, 0.18741608
      %v169 = vmul.f32 %v160, %v168
      %v170 = vadd.f32 %v169, 1.1283791
      %v171 = vmul.f32 %v118, %v170
      %v172 = vmul.f32 %v160, 3.8918573e-05
      %v173 = vadd.f32 %v172, 0.001143296
      %v174 = vmul.f32 %v160, %v173
      %v175 = vadd.f32 %v174, 0.014752088
      %v176 = vmul.f32 %v160, %v175
      %v177 = vadd.f32 %v176, 0.112945676
      %v178 = vmul.f32 %v160, %v177
      %v179 = vadd.f32 %v178, 0.4994258
      %v180 = vmul.f32 %v160, %v179
      %v181 = vadd.f32 %v180, 1.0
      %v182 = vrcp.pop %v181
      %v183 = vmul.f32 %v181, %v182
      %v184 = vsub.f32 1.0, %v183
      %v185 = vmul.f32 %v182, %v184
      %v186 = vadd.f32 %v182, %v185
      %vm187 = vweird.f32 %v181
      %vm188 = vweird.f32 %v182
      %vm189 = vmor %vm187, %vm188
      %v190 = vsel %vm189, %v182, %v186
      %v191 = vand.u32 2147483647, %v181
      %vm192 = vcmp.eq.f32.partialorder %v191, 8.507059e+37
      %v193 = vand.u32 %v181, 2147483648
      %v194 = vor.u32 1.1754944e-38, %v193
      %v195 = vsel %vm192, %v194, %v190
      %v196 = vmul.f32 %v171, %v195
      %v197 = vmin.f32 %v196, 1.0
      %v198 = vmax.f32 %v197, -1.0
      %v199 = vadd.f32 %v158, 1.0
      %v200 = vadd.f32 %v198, 1.0
      %v201 = vmul.f32 %v115, %v199
      %v202 = vmul.f32 %v116, %v200
      %v203 = vsel %vm85, %v201, 0.0
      %204 = vadd.xlane.f32.xlu0 %v203
      %v205 = vpop.xlane.xlu0 %204
      %v206 = vsel %vm85, %v202, 0.0
      %207 = vadd.xlane.f32.xlu0 %v206
      %v208 = vpop.xlane.xlu0 %207
      %v209 = vrcp.pop 32.0
      %v210 = vmul.f32 32.0, %v209
      %v211 = vsub.f32 1.0, %v210
      %v212 = vmul.f32 %v209, %v211
      %v213 = vadd.f32 %v209, %v212
      %vm214 = vweird.f32 %v209
      %v215 = vsel %vm214, %v209, %v213
      %v216 = vmul.f32 %v205, %v215
      %v217 = vmul.f32 %v208, %v215
      %v218 = vsub.f32 %v201, %v216
      %v219 = vsub.f32 %v202, %v217
      %v220 = vmul.f32 %v218, %v218
      %v221 = vmul.f32 %v219, %v219
      %v222 = vsel %vm85, %v220, 0.0
      %223 = vadd.xlane.f32.xlu0 %v222
      %v224 = vpop.xlane.xlu0 %223
      %v225 = vsel %vm85, %v221, 0.0
      %226 = vadd.xlane.f32.xlu0 %v225
      %v227 = vpop.xlane.xlu0 %226
      %v228 = vmul.f32 %v224, %v215
      %v229 = vmul.f32 %v227, %v215
      %v230 = vadd.f32 %v228, 1e-05
      %v231 = vadd.f32 %v229, 1e-05
      %v232 = vrsqrt.pop %v230
      %v233 = vmul.f32 %v232, %v230
      %v234 = vmul.f32 %v233, %v232
      %v235 = vmul.f32 0.5, %v234
      %v236 = vsub.f32 1.5, %v235
      %v237 = vmul.f32 %v232, %v236
      %vm238 = vweird.f32 %v230
      %vm239 = vweird.f32 %v232
      %vm240 = vmor %vm238, %vm239
      %v241 = vsel %vm240, %v232, %v237
      %v242 = vrsqrt.pop %v231
      %v243 = vmul.f32 %v242, %v231
      %v244 = vmul.f32 %v243, %v242
      %v245 = vmul.f32 0.5, %v244
      %v246 = vsub.f32 1.5, %v245
      %v247 = vmul.f32 %v242, %v246
      %vm248 = vweird.f32 %v231
      %vm249 = vweird.f32 %v242
      %vm250 = vmor %vm248, %vm249
      %v251 = vsel %vm250, %v242, %v247
      %v252 = vmul.f32 %v218, %v241
      %v253 = vmul.f32 %v219, %v251
      %v254 = vld [vmem:[%s3] sm:$0x1]
      %v256 = vperm.slane %v254, 0
      %v258 = vmul.f32 %v252, %v256
      %v259 = vmul.f32 %v253, %v256
      %v260 = vld [vmem:[%s4] sm:$0x1]
      %v262 = vperm.slane %v260, 0
      %v264 = vadd.f32 %v258, %v262
      %v265 = vadd.f32 %v259, %v262
      %266 = vst.msk [vmem:[#allocation2] sm:$0xff] %vm85, %v264
      %267 = vst.msk [vmem:[#allocation2 + $0x8] sm:$0xff] %vm85, %v265
    $region41: #{tpu_custom_call.1} parent=1 // pred_fallthru
      _
    %v268 = vld [vmem:[#allocation2] sm:$0xff]
    %v269 = vld [vmem:[#allocation2 + $0x8] sm:$0xff]
    %v270 = vld [vmem:[#allocation8] sm:$0xff]
    %v271 = vld [vmem:[#allocation8 + $0x8] sm:$0xff]
    %v272 = vld [vmem:[#allocation8 + $0x10] sm:$0xff]
    %v273 = vld [vmem:[#allocation8 + $0x18] sm:$0xff]
    %vm274 = vcmask 261120
    %v276 = vsel %vm274, %v268, 0
    %v279 = vsel %vm274, %v269, 0
    %281 = vmatpush.msra.mxu0 0.0
    %282 = vmatpush.msra.mxu0 0.0
    %283 = vmatpush.msra.mxu0 0.0
    %284 = vmatpush.msra.mxu0 0.0
    %285 = vmatpush.msra.mxu0 0.0
    %286 = vmatpush.msra.mxu0 0.0
    %287 = vmatpush.msra.mxu0 0.0
    %288 = vmatpush.msra.mxu0 0.0
    %289 = vmatpush.msra.mxu0 0.0
    %290 = vmatpush.msra.mxu0 0.0
    %291 = vmatpush.msra.mxu0 0.0
    %292 = vmatpush.msra.mxu0 0.0
    %293 = vmatpush.msra.mxu0 %v273
    %294 = vmatpush.msra.mxu0 %v272
    %295 = vmatpush.msra.mxu0 %v271
    %296 = vmatpush.msra.mxu0 %v270
    %297 = vmatmul.f32.gmra.mxu0 %v276
    %v298 = vpop.f32.mrf.mxu0
    %v299 = vadd.f32 0.0, %v298
    %300 = vmatmul.f32.gmra.mxu0 %v279
    %v301 = vpop.f32.mrf.mxu0
    %v302 = vadd.f32 0.0, %v301
    %303 = vdwg.mxu0
    %304 = vst [vmem:[#allocation9] sm:$0xff] %v299
    %305 = vst [vmem:[#allocation9 + $0x8] sm:$0xff] %v302
    // Predicated region
    $region42: #{tpu_custom_call.1} parent=1 // pred_check
      _
    $region43: #{tpu_custom_call.1} parent=1 // pred_check_branch
      %307 = sbr.rel (0) target = $region45
    $region44: #{tpu_custom_call.1} parent=1 // pred_region
      %309 = vsyncadd [#allocation5], 0
      %s310 = sshll.u32 [#allocation9], 4
      %s311 = int_to_ptr.vmem [resolvable:$true] %s310
      %s312 = sshll.u32 %s6, 4
      %s313 = int_to_ptr.hbm [resolvable:$true] %s312
      %318 = dma.vmem_to_hbm [thread:$0]  %s311, 256, %s313, [#allocation5], 128, 128, 8
    $region45: #{tpu_custom_call.1} parent=1 // pred_fallthru
      _
    // Predicated region
    $region46: #{tpu_custom_call.1} parent=1 // pred_check
      _
    $region47: #{tpu_custom_call.1} parent=1 // pred_check_branch
      %320 = sbr.rel (0) target = $region49
    $region48: #{tpu_custom_call.1} parent=1 // pred_region
      %322 = dma.done [#allocation5], 256
    $region49: #{tpu_custom_call.1} parent=1 // pred_fallthru
      _
    %323 = vsyncpa [#allocation4], 1
    %324 = vsyncpa [#allocation7], 1
    %325 = vsyncpa [#allocation5], 1

</llo_original>
